<compile_context>
chip_gen: v6e
topology: v6e:2x2x1
jax: 0.10.0
libtpu: 0.0.40
codegen_flags: <defaults>
</compile_context>

<pallas_src>
import math

import jax
import jax.numpy as jnp
import numpy as np
from jax.experimental import pallas as pl
from jax.experimental.pallas import tpu as pltpu


def _round_up(x, m):
    return (x + m - 1) // m * m


def _make_fused_fcnet_kernel(num_layers):
    """Kernel over one batch tile; all layers computed back-to-back in VMEM/vregs."""

    def kernel(scales_ref, x_ref, *args):
        # args = w0, b0, w1, b1, ..., w_{L-1}, b_{L-1}, o_ref
        #   w_l : (in_pad_l, out_pad_l)  -- already V.T, zero padded
        #   b_l : (1, out_pad_l)
        o_ref = args[-1]
        h = x_ref[...].astype(jnp.float32)           # (tm, in_pad_0)
        for l in range(num_layers):
            w = args[2 * l][...]                     # (in_pad_l, out_pad_l)
            b = args[2 * l + 1][...]                 # (1, out_pad_l)
            scale = scales_ref[l]                    # scalar g/||V||_F from SMEM
            y = jnp.dot(h, w, preferred_element_type=jnp.float32)
            y = y * scale + b                        # scale the OUTPUT, not W
            h = jnp.maximum(y, 0.0)
        o_ref[...] = h.astype(o_ref.dtype)

    return kernel


def fcnet_relu_forward(x, params, *, tm=128, feat_align=128):
    """Fused forward pass of FCNet_relu via a single pallas_call.

    x      : (batch, dims[0]) activations.
    params : list of (V[out, in], g_scalar, b[out]) per layer.
    """
    B, in_dim = x.shape
    L = len(params)
    dims = [in_dim] + [v.shape[0] for (v, _, _) in params]
    dims_p = [_round_up(d, feat_align) for d in dims]
    Bp = _round_up(B, tm)

    # Pad input rows/lanes with zeros (sliced off at the end).
    xp = jnp.zeros((Bp, dims_p[0]), jnp.float32)
    xp = xp.at[:B, :in_dim].set(x.astype(jnp.float32))

    # Precompute per-layer weight-norm scale (tiny XLA reduction, done ONCE),
    # pre-transpose V to (in, out) for a transpose-free MXU matmul, pad to 128s.
    scales, operands = [], []
    in_specs = [
        pl.BlockSpec(memory_space=pltpu.MemorySpace.SMEM),       # scales (L,)
        pl.BlockSpec((tm, dims_p[0]), lambda i: (i, 0)),         # x tile
    ]
    for l, (v, g, b) in enumerate(params):
        out_dim, in_d = v.shape
        vf = v.astype(jnp.float32)
        scales.append((g / jnp.sqrt(jnp.sum(vf * vf))).astype(jnp.float32))

        wt = jnp.zeros((dims_p[l], dims_p[l + 1]), jnp.float32)
        wt = wt.at[:in_d, :out_dim].set(vf.T)                    # (in_pad, out_pad)
        bp = jnp.zeros((1, dims_p[l + 1]), jnp.float32)
        bp = bp.at[0, :out_dim].set(b.astype(jnp.float32))

        # Grid-invariant weights/bias: constant index_map (kept resident per step).
        # NOTE: for large layers on v6e/v7x, store these in bf16 to halve VMEM/HBM
        # traffic; f32 kept here since the demo layers are tiny.
        in_specs.append(pl.BlockSpec((dims_p[l], dims_p[l + 1]), lambda i: (0, 0)))
        in_specs.append(pl.BlockSpec((1, dims_p[l + 1]), lambda i: (0, 0)))
        operands.extend([wt, bp])

    scales_arr = jnp.stack(scales).reshape(L)

    out_padded = pl.pallas_call(
        _make_fused_fcnet_kernel(L),
        out_shape=jax.ShapeDtypeStruct((Bp, dims_p[-1]), x.dtype),
        grid_spec=pltpu.PrefetchScalarGridSpec(
            num_scalar_prefetch=0,
            grid=(Bp // tm,),                                    # batch tiles only
            in_specs=in_specs,
            out_specs=pl.BlockSpec((tm, dims_p[-1]), lambda i: (i, 0)),
        ),
        compiler_params=pltpu.CompilerParams(
            dimension_semantics=("parallel",),                   # megacore-shardable
        ),
    )(scales_arr, xp, *operands)

    return out_padded[:B, :dims[-1]]


def init_fcnet_relu_params(key, dims):
    """Params mimicking nn.Linear + weight_norm(dim=None) init.

    Returns list of (V, g, b); g initialized to ||V||_F so the effective weight
    equals V at init (as PyTorch's weight_norm does).
    """
    params = []
    for i in range(len(dims) - 1):
        in_dim, out_dim = dims[i], dims[i + 1]
        key, kw, kb = jax.random.split(key, 3)
        bound = 1.0 / math.sqrt(in_dim)
        v = jax.random.uniform(kw, (out_dim, in_dim), jnp.float32, -bound, bound)
        b = jax.random.uniform(kb, (out_dim,), jnp.float32, -bound, bound)
        g = jnp.sqrt(jnp.sum(v * v))   # scalar gain (dim=None)
        params.append((v, g, b))
    return params


def _reference_forward(x, params):
    h = x.astype(jnp.float32)
    for (v, g, b) in params:
        w = v * (g / jnp.sqrt(jnp.sum(v * v)))
        h = jnp.maximum(h @ w.T + b, 0.0)
    return h


if __name__ == "__main__":
    key = jax.random.PRNGKey(0)
    dims = [32, 64, 16]          # FCNet_relu(dims): 32 -> 64 -> 16
    batch = 8

    key, kx, kp = jax.random.split(key, 3)
    x = jax.random.normal(kx, (batch, dims[0]), jnp.float32)
    params = init_fcnet_relu_params(kp, dims)

    out = fcnet_relu_forward(x, params)
    out = jax.block_until_ready(out)

    ref = _reference_forward(x, params)
    assert out.shape == (batch, dims[-1])
    assert np.allclose(np.asarray(out), np.asarray(ref), rtol=1e-4, atol=1e-5)

    print("KERNEL_OK")
</pallas_src>

<mosaic_0001>
module attributes {stable_mosaic.version = 11 : i64} {
  func.func @kernel(%arg0: i32, %arg1: memref<2xf32, #tpu.memory_space<smem>>, %arg2: memref<128x128xf32, #tpu.memory_space<vmem>>, %arg3: memref<128x128xf32, #tpu.memory_space<vmem>>, %arg4: memref<1x128xf32, #tpu.memory_space<vmem>>, %arg5: memref<128x128xf32, #tpu.memory_space<vmem>>, %arg6: memref<1x128xf32, #tpu.memory_space<vmem>>, %arg7: memref<128x128xf32, #tpu.memory_space<vmem>>) attributes {dimension_semantics = [#tpu.dimension_semantics<parallel>], iteration_bounds = array<i64: 1>, scalar_prefetch = 0 : i64, scratch_operands = 0 : i64, tpu.core_type = #tpu.core_type<tc>, window_params = [{transform_indices = @transform_0, window_bounds = array<i64: 2>}, {transform_indices = @transform_1, window_bounds = array<i64: 128, 128>}, {pipeline_mode = #tpu.pipeline_mode<synchronous>, transform_indices = @transform_2, window_bounds = array<i64: 128, 128>}, {pipeline_mode = #tpu.pipeline_mode<synchronous>, transform_indices = @transform_3, window_bounds = array<i64: 1, 128>}, {pipeline_mode = #tpu.pipeline_mode<synchronous>, transform_indices = @transform_4, window_bounds = array<i64: 128, 128>}, {pipeline_mode = #tpu.pipeline_mode<synchronous>, transform_indices = @transform_5, window_bounds = array<i64: 1, 128>}, {transform_indices = @transform_6, window_bounds = array<i64: 128, 128>}]} {
    %c0 = arith.constant 0 : index
    %c0_0 = arith.constant 0 : index
    %0 = vector.load %arg2[%c0, %c0_0] : memref<128x128xf32, #tpu.memory_space<vmem>>, vector<128x128xf32>
    %c0_1 = arith.constant 0 : index
    %c0_2 = arith.constant 0 : index
    %1 = vector.load %arg3[%c0_1, %c0_2] : memref<128x128xf32, #tpu.memory_space<vmem>>, vector<128x128xf32>
    %c0_3 = arith.constant 0 : index
    %c0_4 = arith.constant 0 : index
    %2 = vector.load %arg4[%c0_3, %c0_4] : memref<1x128xf32, #tpu.memory_space<vmem>>, vector<1x128xf32>
    %c0_5 = arith.constant 0 : index
    %3 = memref.load %arg1[%c0_5] : memref<2xf32, #tpu.memory_space<smem>>
    %cst = arith.constant dense<0.000000e+00> : vector<128x128xf32>
    %4 = tpu.matmul %0, %1, %cst {dimension_numbers = #tpu.dot_dimension_numbers<[1], [0], [0], [1], [0, 0, 1, 1], [], []>} : vector<128x128xf32>, vector<128x128xf32>, vector<128x128xf32> -> vector<128x128xf32>
    %5 = vector.broadcast %3 : f32 to vector<128x128xf32>
    %6 = arith.mulf %4, %5 : vector<128x128xf32>
    %7 = vector.broadcast %2 : vector<1x128xf32> to vector<128x128xf32>
    %8 = arith.addf %6, %7 : vector<128x128xf32>
    %cst_6 = arith.constant 0.000000e+00 : f32
    %9 = vector.broadcast %cst_6 : f32 to vector<128x128xf32>
    %10 = arith.maximumf %8, %9 : vector<128x128xf32>
    %c0_7 = arith.constant 0 : index
    %c0_8 = arith.constant 0 : index
    %11 = vector.load %arg5[%c0_7, %c0_8] : memref<128x128xf32, #tpu.memory_space<vmem>>, vector<128x128xf32>
    %c0_9 = arith.constant 0 : index
    %c0_10 = arith.constant 0 : index
    %12 = vector.load %arg6[%c0_9, %c0_10] : memref<1x128xf32, #tpu.memory_space<vmem>>, vector<1x128xf32>
    %c1 = arith.constant 1 : index
    %13 = memref.load %arg1[%c1] : memref<2xf32, #tpu.memory_space<smem>>
    %cst_11 = arith.constant dense<0.000000e+00> : vector<128x128xf32>
    %14 = tpu.matmul %10, %11, %cst_11 {dimension_numbers = #tpu.dot_dimension_numbers<[1], [0], [0], [1], [0, 0, 1, 1], [], []>} : vector<128x128xf32>, vector<128x128xf32>, vector<128x128xf32> -> vector<128x128xf32>
    %15 = vector.broadcast %13 : f32 to vector<128x128xf32>
    %16 = arith.mulf %14, %15 : vector<128x128xf32>
    %17 = vector.broadcast %12 : vector<1x128xf32> to vector<128x128xf32>
    %18 = arith.addf %16, %17 : vector<128x128xf32>
    %cst_12 = arith.constant 0.000000e+00 : f32
    %19 = vector.broadcast %cst_12 : f32 to vector<128x128xf32>
    %20 = arith.maximumf %18, %19 : vector<128x128xf32>
    %c0_13 = arith.constant 0 : index
    %c0_14 = arith.constant 0 : index
    %21 = vector.load %arg7[%c0_13, %c0_14] : memref<128x128xf32, #tpu.memory_space<vmem>>, vector<128x128xf32>
    tpu.vector_store %arg7[%c0_13, %c0_14], %20 {strides = array<i32>} : memref<128x128xf32, #tpu.memory_space<vmem>>, vector<128x128xf32>,
    return
  }
  func.func @transform_0(%arg0: i32) -> i32 {
    %c0_i32 = arith.constant 0 : i32
    %c0_i32_0 = arith.constant 0 : i32
    return %c0_i32 : i32
  }
  func.func @transform_1(%arg0: i32) -> (i32, i32) {
    %c0_i32 = arith.constant 0 : i32
    %c0_i32_0 = arith.constant 0 : i32
    return %arg0, %c0_i32 : i32, i32
  }
  func.func @transform_2(%arg0: i32) -> (i32, i32) {
    %c0_i32 = arith.constant 0 : i32
    %c0_i32_0 = arith.constant 0 : i32
    %c0_i32_1 = arith.constant 0 : i32
    return %c0_i32, %c0_i32_0 : i32, i32
  }
  func.func @transform_3(%arg0: i32) -> (i32, i32) {
    %c0_i32 = arith.constant 0 : i32
    %c0_i32_0 = arith.constant 0 : i32
    %c0_i32_1 = arith.constant 0 : i32
    return %c0_i32, %c0_i32_0 : i32, i32
  }
  func.func @transform_4(%arg0: i32) -> (i32, i32) {
    %c0_i32 = arith.constant 0 : i32
    %c0_i32_0 = arith.constant 0 : i32
    %c0_i32_1 = arith.constant 0 : i32
    return %c0_i32, %c0_i32_0 : i32, i32
  }
  func.func @transform_5(%arg0: i32) -> (i32, i32) {
    %c0_i32 = arith.constant 0 : i32
    %c0_i32_0 = arith.constant 0 : i32
    %c0_i32_1 = arith.constant 0 : i32
    return %c0_i32, %c0_i32_0 : i32, i32
  }
  func.func @transform_6(%arg0: i32) -> (i32, i32) {
    %c0_i32 = arith.constant 0 : i32
    %c0_i32_0 = arith.constant 0 : i32
    return %arg0, %c0_i32 : i32, i32
  }
}

</mosaic_0001>

<llo_original>
// kernel: tpu_custom_call.1
$region0: #{tpu_custom_call.1}
  #allocation0 [shape = 'u32[]', space=smem, size = 0x4, offset = 0x4, fixed_abs, tag = 'smem constant byte address 0x4 - core index']
  #allocation1 [shape = 'u32[144,128]{1,0:T(1,128)}', space=vmem, size = 0x12000, scoped, tag = 'internal scratch']
  %s0 = inlined_call_operand.hbm [shape: f32[2], index: 0, kind: input, shape index: {}]
  %s1 = inlined_call_operand.hbm [shape: f32[128,128], index: 1, kind: input, shape index: {}]
  %s2 = inlined_call_operand.hbm [shape: f32[128,128], index: 2, kind: input, shape index: {}]
  %s3 = inlined_call_operand.vmem [shape: f32[1,128], index: 3, kind: input, shape index: {}]
  %s4 = inlined_call_operand.hbm [shape: f32[128,128], index: 4, kind: input, shape index: {}]
  %s5 = inlined_call_operand.vmem [shape: f32[1,128], index: 5, kind: input, shape index: {}]
  %s6 = inlined_call_operand.hbm [shape: f32[128,128], index: 6, kind: output, shape index: {}]
  %s7 = sld [smem:[#allocation0]]
  $region50: #{tpu_custom_call.1} parent=0
    _
  %s9 = ssub.s32 1, %s7
  %s10 = scalar_select 0, %s9, %s7
  $region1: #{tpu_custom_call.1} parent=0
    #allocation2 [shape = 'u8[512]{0}', space=smem, size = 0x200, scoped, tag = 'input window, operand 0, single buffered']
    #allocation3 [shape = 's32[1]{0}', space=sflag, size = 0x4, scoped, tag = 'scoped memory for tpu_custom_call.1']
    #allocation4 [shape = 's32[1]{0}', space=sflag, size = 0x4, scoped, tag = 'scoped memory for tpu_custom_call.1']
    #allocation5 [shape = 's32[1]{0}', space=sflag, size = 0x4, scoped, tag = 'scoped memory for tpu_custom_call.1']
    #allocation6 [shape = 'u8[65536]{0}', space=vmem, size = 0x10000, scoped, tag = 'input window, operand 1, single buffered']
    #allocation7 [shape = 'u8[65536]{0}', space=vmem, size = 0x10000, scoped, tag = 'input window, operand 2, single buffered']
    #allocation8 [shape = 's32[1]{0}', space=sflag, size = 0x4, scoped, tag = 'scoped memory for tpu_custom_call.1']
    #allocation9 [shape = 'u8[65536]{0}', space=vmem, size = 0x10000, scoped, tag = 'input window, operand 4, single buffered']
    #allocation10 [shape = 'u8[65536]{0}', space=vmem, size = 0x10000, scoped, tag = 'output window, operand 0, single buffered']
    %11 = vsyncpa [#allocation5], 0
    %12 = vsyncpa [#allocation3], 0
    %13 = vsyncpa [#allocation8], 0
    %14 = vsyncpa [#allocation4], 0
    // Predicated region
    $region2: #{tpu_custom_call.1} parent=1 // pred_check
      _
    $region3: #{tpu_custom_call.1} parent=1 // pred_check_branch
      %16 = sbr.rel (0) target = $region5
    $region4: #{tpu_custom_call.1} parent=1 // pred_region
      %s18 = ssub.s32 16, 16
      %19 = vsyncadd [#allocation5], %s18
      %22 = dma.hbm_to_smem %s0, 16, [#allocation2], [#allocation5]
    $region5: #{tpu_custom_call.1} parent=1 // pred_fallthru
      _
    // Predicated region
    $region6: #{tpu_custom_call.1} parent=1 // pred_check
      _
    $region7: #{tpu_custom_call.1} parent=1 // pred_check_branch
      %24 = sbr.rel (0) target = $region9
    $region8: #{tpu_custom_call.1} parent=1 // pred_region
      %s26 = ssub.s32 2048, 2048
      %27 = vsyncadd [#allocation3], %s26
      %s28 = sshll.u32 [#allocation6], 4
      %s29 = int_to_ptr.vmem [resolvable:$true] %s28
      %34 = dma.hbm_to_vmem [thread:$0]  %s1, 2048, %s29, [#allocation3], 128, 128, 8
    $region9: #{tpu_custom_call.1} parent=1 // pred_fallthru
      _
    // Predicated region
    $region10: #{tpu_custom_call.1} parent=1 // pred_check
      _
    $region11: #{tpu_custom_call.1} parent=1 // pred_check_branch
      %36 = sbr.rel (0) target = $region13
    $region12: #{tpu_custom_call.1} parent=1 // pred_region
      %s38 = ssub.s32 2048, 2048
      %39 = vsyncadd [#allocation8], %s38
      %s40 = sshll.u32 [#allocation7], 4
      %s41 = int_to_ptr.vmem [resolvable:$true] %s40
      %46 = dma.hbm_to_vmem [thread:$0]  %s2, 2048, %s41, [#allocation8], 128, 128, 8
    $region13: #{tpu_custom_call.1} parent=1 // pred_fallthru
      _
    // Predicated region
    $region14: #{tpu_custom_call.1} parent=1 // pred_check
      _
    $region15: #{tpu_custom_call.1} parent=1 // pred_check_branch
      %48 = sbr.rel (0) target = $region17
    $region16: #{tpu_custom_call.1} parent=1 // pred_region
      _
    $region17: #{tpu_custom_call.1} parent=1 // pred_fallthru
      _
    // Predicated region
    $region18: #{tpu_custom_call.1} parent=1 // pred_check
      _
    $region19: #{tpu_custom_call.1} parent=1 // pred_check_branch
      %50 = sbr.rel (0) target = $region21
    $region20: #{tpu_custom_call.1} parent=1 // pred_region
      %s52 = ssub.s32 2048, 2048
      %53 = vsyncadd [#allocation8], %s52
      %s54 = sshll.u32 [#allocation9], 4
      %s55 = int_to_ptr.vmem [resolvable:$true] %s54
      %60 = dma.hbm_to_vmem [thread:$0]  %s4, 2048, %s55, [#allocation8], 128, 128, 8
    $region21: #{tpu_custom_call.1} parent=1 // pred_fallthru
      _
    // Predicated region
    $region22: #{tpu_custom_call.1} parent=1 // pred_check
      _
    $region23: #{tpu_custom_call.1} parent=1 // pred_check_branch
      %62 = sbr.rel (0) target = $region25
    $region24: #{tpu_custom_call.1} parent=1 // pred_region
      _
    $region25: #{tpu_custom_call.1} parent=1 // pred_fallthru
      _
    // Predicated region
    $region26: #{tpu_custom_call.1} parent=1 // pred_check
      _
    $region27: #{tpu_custom_call.1} parent=1 // pred_check_branch
      %64 = sbr.rel (0) target = $region29
    $region28: #{tpu_custom_call.1} parent=1 // pred_region
      %65 = dma.done [#allocation5], 16
    $region29: #{tpu_custom_call.1} parent=1 // pred_fallthru
      _
    // Predicated region
    $region30: #{tpu_custom_call.1} parent=1 // pred_check
      _
    $region31: #{tpu_custom_call.1} parent=1 // pred_check_branch
      %67 = sbr.rel (0) target = $region33
    $region32: #{tpu_custom_call.1} parent=1 // pred_region
      %68 = dma.done [#allocation3], 2048
    $region33: #{tpu_custom_call.1} parent=1 // pred_fallthru
      _
    // Predicated region
    $region34: #{tpu_custom_call.1} parent=1 // pred_check
      _
    $region35: #{tpu_custom_call.1} parent=1 // pred_check_branch
      %70 = sbr.rel (0) target = $region37
    $region36: #{tpu_custom_call.1} parent=1 // pred_region
      %71 = dma.done [#allocation8], 2048
    $region37: #{tpu_custom_call.1} parent=1 // pred_fallthru
      _
    // Predicated region
    $region38: #{tpu_custom_call.1} parent=1 // pred_check
      _
    $region39: #{tpu_custom_call.1} parent=1 // pred_check_branch
      %73 = sbr.rel (0) target = $region41
    $region40: #{tpu_custom_call.1} parent=1 // pred_region
      %74 = dma.done [#allocation8], 2048
    $region41: #{tpu_custom_call.1} parent=1 // pred_fallthru
      _
    %75 = sfence
    %v76 = vld [vmem:[#allocation6] sm:$0xff]
    %v77 = vld [vmem:[#allocation6 + $0x8] sm:$0xff]
    %v78 = vld [vmem:[#allocation6 + $0x10] sm:$0xff]
    %v79 = vld [vmem:[#allocation6 + $0x18] sm:$0xff]
    %v80 = vld [vmem:[#allocation6 + $0x20] sm:$0xff]
    %v81 = vld [vmem:[#allocation6 + $0x28] sm:$0xff]
    %v82 = vld [vmem:[#allocation6 + $0x30] sm:$0xff]
    %v83 = vld [vmem:[#allocation6 + $0x38] sm:$0xff]
    %v84 = vld [vmem:[#allocation6 + $0x40] sm:$0xff]
    %v85 = vld [vmem:[#allocation6 + $0x48] sm:$0xff]
    %v86 = vld [vmem:[#allocation6 + $0x50] sm:$0xff]
    %v87 = vld [vmem:[#allocation6 + $0x58] sm:$0xff]
    %v88 = vld [vmem:[#allocation6 + $0x60] sm:$0xff]
    %v89 = vld [vmem:[#allocation6 + $0x68] sm:$0xff]
    %v90 = vld [vmem:[#allocation6 + $0x70] sm:$0xff]
    %v91 = vld [vmem:[#allocation6 + $0x78] sm:$0xff]
    %v92 = vld [vmem:[#allocation7] sm:$0xff]
    %v93 = vld [vmem:[#allocation7 + $0x8] sm:$0xff]
    %v94 = vld [vmem:[#allocation7 + $0x10] sm:$0xff]
    %v95 = vld [vmem:[#allocation7 + $0x18] sm:$0xff]
    %v96 = vld [vmem:[#allocation7 + $0x20] sm:$0xff]
    %v97 = vld [vmem:[#allocation7 + $0x28] sm:$0xff]
    %v98 = vld [vmem:[#allocation7 + $0x30] sm:$0xff]
    %v99 = vld [vmem:[#allocation7 + $0x38] sm:$0xff]
    %v100 = vld [vmem:[#allocation7 + $0x40] sm:$0xff]
    %v101 = vld [vmem:[#allocation7 + $0x48] sm:$0xff]
    %v102 = vld [vmem:[#allocation7 + $0x50] sm:$0xff]
    %v103 = vld [vmem:[#allocation7 + $0x58] sm:$0xff]
    %v104 = vld [vmem:[#allocation7 + $0x60] sm:$0xff]
    %v105 = vld [vmem:[#allocation7 + $0x68] sm:$0xff]
    %v106 = vld [vmem:[#allocation7 + $0x70] sm:$0xff]
    %v107 = vld [vmem:[#allocation7 + $0x78] sm:$0xff]
    %v108 = vld [vmem:[%s3] sm:$0x1]
    %s109 = sld [smem:[#allocation2]]
    %110 = vmatprep.subr.mxu0 0.0
    %111 = vmatpush1.msra.mxu0 %v107
    %112 = vmatprep.subr.mxu0 0.0
    %113 = vmatpush1.msra.mxu0 %v106
    %114 = vmatprep.subr.mxu0 0.0
    %115 = vmatpush1.msra.mxu0 %v105
    %116 = vmatprep.subr.mxu0 0.0
    %117 = vmatpush1.msra.mxu0 %v104
    %118 = vmatprep.subr.mxu0 0.0
    %119 = vmatpush1.msra.mxu0 %v103
    %120 = vmatprep.subr.mxu0 0.0
    %121 = vmatpush1.msra.mxu0 %v102
    %122 = vmatprep.subr.mxu0 0.0
    %123 = vmatpush1.msra.mxu0 %v101
    %124 = vmatprep.subr.mxu0 0.0
    %125 = vmatpush1.msra.mxu0 %v100
    %126 = vmatprep.subr.mxu0 0.0
    %127 = vmatpush1.msra.mxu0 %v99
    %128 = vmatprep.subr.mxu0 0.0
    %129 = vmatpush1.msra.mxu0 %v98
    %130 = vmatprep.subr.mxu0 0.0
    %131 = vmatpush1.msra.mxu0 %v97
    %132 = vmatprep.subr.mxu0 0.0
    %133 = vmatpush1.msra.mxu0 %v96
    %134 = vmatprep.subr.mxu0 0.0
    %135 = vmatpush1.msra.mxu0 %v95
    %136 = vmatprep.subr.mxu0 0.0
    %137 = vmatpush1.msra.mxu0 %v94
    %138 = vmatprep.subr.mxu0 0.0
    %139 = vmatpush1.msra.mxu0 %v93
    %140 = vmatprep.subr.mxu0 0.0
    %141 = vmatpush1.msra.mxu0 %v92
    %142 = vmatprep.subr.mxu0 0.0
    %143 = vmatpush2.msra.mxu0 0.0
    %144 = vmatprep.subr.mxu0 0.0
    %145 = vmatpush2.msra.mxu0 0.0
    %146 = vmatprep.subr.mxu0 0.0
    %147 = vmatpush2.msra.mxu0 0.0
    %148 = vmatprep.subr.mxu0 0.0
    %149 = vmatpush2.msra.mxu0 0.0
    %150 = vmatprep.subr.mxu0 0.0
    %151 = vmatpush2.msra.mxu0 0.0
    %152 = vmatprep.subr.mxu0 0.0
    %153 = vmatpush2.msra.mxu0 0.0
    %154 = vmatprep.subr.mxu0 0.0
    %155 = vmatpush2.msra.mxu0 0.0
    %156 = vmatprep.subr.mxu0 0.0
    %157 = vmatpush2.msra.mxu0 0.0
    %158 = vmatprep.subr.mxu0 0.0
    %159 = vmatpush2.msra.mxu0 0.0
    %160 = vmatprep.subr.mxu0 0.0
    %161 = vmatpush2.msra.mxu0 0.0
    %162 = vmatprep.subr.mxu0 0.0
    %163 = vmatpush2.msra.mxu0 0.0
    %164 = vmatprep.subr.mxu0 0.0
    %165 = vmatpush2.msra.mxu0 0.0
    %166 = vmatprep.subr.mxu0 0.0
    %167 = vmatpush2.msra.mxu0 0.0
    %168 = vmatprep.subr.mxu0 0.0
    %169 = vmatpush2.msra.mxu0 0.0
    %170 = vmatprep.subr.mxu0 0.0
    %171 = vmatpush2.msra.mxu0 0.0
    %172 = vmatprep.subr.mxu0 0.0
    %173 = vmatpush2.msra.mxu0 0.0
    %174 = vmatprep.mubr.f32.mxu0 0.0
    %175 = vmatmul.mubr.f32.gmra.mxu0 %v76
    %v176 = vpop.f32.mrf.mxu0
    %v177 = vadd.f32 0.0, %v176
    %v178 = vpop.f32.mrf.mxu0
    %179 = vmatprep.mubr.f32.mxu0 0.0
    %180 = vmatmul.mubr.f32.gmra.mxu0 %v77
    %v181 = vpop.f32.mrf.mxu0
    %v182 = vadd.f32 0.0, %v181
    %v183 = vpop.f32.mrf.mxu0
    %184 = vmatprep.mubr.f32.mxu0 0.0
    %185 = vmatmul.mubr.f32.gmra.mxu0 %v78
    %v186 = vpop.f32.mrf.mxu0
    %v187 = vadd.f32 0.0, %v186
    %v188 = vpop.f32.mrf.mxu0
    %189 = vmatprep.mubr.f32.mxu0 0.0
    %190 = vmatmul.mubr.f32.gmra.mxu0 %v79
    %v191 = vpop.f32.mrf.mxu0
    %v192 = vadd.f32 0.0, %v191
    %v193 = vpop.f32.mrf.mxu0
    %194 = vmatprep.mubr.f32.mxu0 0.0
    %195 = vmatmul.mubr.f32.gmra.mxu0 %v80
    %v196 = vpop.f32.mrf.mxu0
    %v197 = vadd.f32 0.0, %v196
    %v198 = vpop.f32.mrf.mxu0
    %199 = vmatprep.mubr.f32.mxu0 0.0
    %200 = vmatmul.mubr.f32.gmra.mxu0 %v81
    %v201 = vpop.f32.mrf.mxu0
    %v202 = vadd.f32 0.0, %v201
    %v203 = vpop.f32.mrf.mxu0
    %204 = vmatprep.mubr.f32.mxu0 0.0
    %205 = vmatmul.mubr.f32.gmra.mxu0 %v82
    %v206 = vpop.f32.mrf.mxu0
    %v207 = vadd.f32 0.0, %v206
    %v208 = vpop.f32.mrf.mxu0
    %209 = vmatprep.mubr.f32.mxu0 0.0
    %210 = vmatmul.mubr.f32.gmra.mxu0 %v83
    %v211 = vpop.f32.mrf.mxu0
    %v212 = vadd.f32 0.0, %v211
    %v213 = vpop.f32.mrf.mxu0
    %214 = vmatprep.mubr.f32.mxu0 0.0
    %215 = vmatmul.mubr.f32.gmra.mxu0 %v84
    %v216 = vpop.f32.mrf.mxu0
    %v217 = vadd.f32 0.0, %v216
    %v218 = vpop.f32.mrf.mxu0
    %219 = vmatprep.mubr.f32.mxu0 0.0
    %220 = vmatmul.mubr.f32.gmra.mxu0 %v85
    %v221 = vpop.f32.mrf.mxu0
    %v222 = vadd.f32 0.0, %v221
    %v223 = vpop.f32.mrf.mxu0
    %224 = vmatprep.mubr.f32.mxu0 0.0
    %225 = vmatmul.mubr.f32.gmra.mxu0 %v86
    %v226 = vpop.f32.mrf.mxu0
    %v227 = vadd.f32 0.0, %v226
    %v228 = vpop.f32.mrf.mxu0
    %229 = vmatprep.mubr.f32.mxu0 0.0
    %230 = vmatmul.mubr.f32.gmra.mxu0 %v87
    %v231 = vpop.f32.mrf.mxu0
    %v232 = vadd.f32 0.0, %v231
    %v233 = vpop.f32.mrf.mxu0
    %234 = vmatprep.mubr.f32.mxu0 0.0
    %235 = vmatmul.mubr.f32.gmra.mxu0 %v88
    %v236 = vpop.f32.mrf.mxu0
    %v237 = vadd.f32 0.0, %v236
    %v238 = vpop.f32.mrf.mxu0
    %239 = vmatprep.mubr.f32.mxu0 0.0
    %240 = vmatmul.mubr.f32.gmra.mxu0 %v89
    %v241 = vpop.f32.mrf.mxu0
    %v242 = vadd.f32 0.0, %v241
    %v243 = vpop.f32.mrf.mxu0
    %244 = vmatprep.mubr.f32.mxu0 0.0
    %245 = vmatmul.mubr.f32.gmra.mxu0 %v90
    %v246 = vpop.f32.mrf.mxu0
    %v247 = vadd.f32 0.0, %v246
    %v248 = vpop.f32.mrf.mxu0
    %249 = vmatprep.mubr.f32.mxu0 0.0
    %250 = vmatmul.mubr.f32.gmra.mxu0 %v91
    %v251 = vpop.f32.mrf.mxu0
    %v252 = vadd.f32 0.0, %v251
    %v253 = vpop.f32.mrf.mxu0
    %254 = vdwg.mxu0
    %v255 = vstv %s109
    %v256 = vmul.f32 %v177, %v255
    %v257 = vmul.f32 %v182, %v255
    %v258 = vmul.f32 %v187, %v255
    %v259 = vmul.f32 %v192, %v255
    %v260 = vmul.f32 %v197, %v255
    %v261 = vmul.f32 %v202, %v255
    %v262 = vmul.f32 %v207, %v255
    %v263 = vmul.f32 %v212, %v255
    %v264 = vmul.f32 %v217, %v255
    %v265 = vmul.f32 %v222, %v255
    %v266 = vmul.f32 %v227, %v255
    %v267 = vmul.f32 %v232, %v255
    %v268 = vmul.f32 %v237, %v255
    %v269 = vmul.f32 %v242, %v255
    %v270 = vmul.f32 %v247, %v255
    %v271 = vmul.f32 %v252, %v255
    %v273 = vlaneseq
    %v274 = vshrl.u32 %v273, 7
    %v275 = vsub.s32 0, %v274
    %v276 = vrot.slane %v108, %v275
    %v278 = vadd.f32 %v256, %v276
    %v279 = vadd.f32 %v257, %v276
    %v280 = vadd.f32 %v258, %v276
    %v281 = vadd.f32 %v259, %v276
    %v282 = vadd.f32 %v260, %v276
    %v283 = vadd.f32 %v261, %v276
    %v284 = vadd.f32 %v262, %v276
    %v285 = vadd.f32 %v263, %v276
    %v286 = vadd.f32 %v264, %v276
    %v287 = vadd.f32 %v265, %v276
    %v288 = vadd.f32 %v266, %v276
    %v289 = vadd.f32 %v267, %v276
    %v290 = vadd.f32 %v268, %v276
    %v291 = vadd.f32 %v269, %v276
    %v292 = vadd.f32 %v270, %v276
    %v293 = vadd.f32 %v271, %v276
    %v294 = vmax.f32 %v278, 0.0
    %v295 = vmax.f32 %v279, 0.0
    %v296 = vmax.f32 %v280, 0.0
    %v297 = vmax.f32 %v281, 0.0
    %v298 = vmax.f32 %v282, 0.0
    %v299 = vmax.f32 %v283, 0.0
    %v300 = vmax.f32 %v284, 0.0
    %v301 = vmax.f32 %v285, 0.0
    %v302 = vmax.f32 %v286, 0.0
    %v303 = vmax.f32 %v287, 0.0
    %v304 = vmax.f32 %v288, 0.0
    %v305 = vmax.f32 %v289, 0.0
    %v306 = vmax.f32 %v290, 0.0
    %v307 = vmax.f32 %v291, 0.0
    %v308 = vmax.f32 %v292, 0.0
    %v309 = vmax.f32 %v293, 0.0
    %v310 = vld [vmem:[#allocation9] sm:$0xff]
    %v311 = vld [vmem:[#allocation9 + $0x8] sm:$0xff]
    %v312 = vld [vmem:[#allocation9 + $0x10] sm:$0xff]
    %v313 = vld [vmem:[#allocation9 + $0x18] sm:$0xff]
    %v314 = vld [vmem:[#allocation9 + $0x20] sm:$0xff]
    %v315 = vld [vmem:[#allocation9 + $0x28] sm:$0xff]
    %v316 = vld [vmem:[#allocation9 + $0x30] sm:$0xff]
    %v317 = vld [vmem:[#allocation9 + $0x38] sm:$0xff]
    %v318 = vld [vmem:[#allocation9 + $0x40] sm:$0xff]
    %v319 = vld [vmem:[#allocation9 + $0x48] sm:$0xff]
    %v320 = vld [vmem:[#allocation9 + $0x50] sm:$0xff]
    %v321 = vld [vmem:[#allocation9 + $0x58] sm:$0xff]
    %v322 = vld [vmem:[#allocation9 + $0x60] sm:$0xff]
    %v323 = vld [vmem:[#allocation9 + $0x68] sm:$0xff]
    %v324 = vld [vmem:[#allocation9 + $0x70] sm:$0xff]
    %v325 = vld [vmem:[#allocation9 + $0x78] sm:$0xff]
    %v326 = vld [vmem:[%s5] sm:$0x1]
    %s327 = sld [smem:[#allocation2 + $0x1]]
    %328 = vmatprep.subr.mxu0 0.0
    %329 = vmatpush1.msra.mxu0 %v325
    %330 = vmatprep.subr.mxu0 0.0
    %331 = vmatpush1.msra.mxu0 %v324
    %332 = vmatprep.subr.mxu0 0.0
    %333 = vmatpush1.msra.mxu0 %v323
    %334 = vmatprep.subr.mxu0 0.0
    %335 = vmatpush1.msra.mxu0 %v322
    %336 = vmatprep.subr.mxu0 0.0
    %337 = vmatpush1.msra.mxu0 %v321
    %338 = vmatprep.subr.mxu0 0.0
    %339 = vmatpush1.msra.mxu0 %v320
    %340 = vmatprep.subr.mxu0 0.0
    %341 = vmatpush1.msra.mxu0 %v319
    %342 = vmatprep.subr.mxu0 0.0
    %343 = vmatpush1.msra.mxu0 %v318
    %344 = vmatprep.subr.mxu0 0.0
    %345 = vmatpush1.msra.mxu0 %v317
    %346 = vmatprep.subr.mxu0 0.0
    %347 = vmatpush1.msra.mxu0 %v316
    %348 = vmatprep.subr.mxu0 0.0
    %349 = vmatpush1.msra.mxu0 %v315
    %350 = vmatprep.subr.mxu0 0.0
    %351 = vmatpush1.msra.mxu0 %v314
    %352 = vmatprep.subr.mxu0 0.0
    %353 = vmatpush1.msra.mxu0 %v313
    %354 = vmatprep.subr.mxu0 0.0
    %355 = vmatpush1.msra.mxu0 %v312
    %356 = vmatprep.subr.mxu0 0.0
    %357 = vmatpush1.msra.mxu0 %v311
    %358 = vmatprep.subr.mxu0 0.0
    %359 = vmatpush1.msra.mxu0 %v310
    %360 = vmatprep.subr.mxu0 0.0
    %361 = vmatpush2.msra.mxu0 0.0
    %362 = vmatprep.subr.mxu0 0.0
    %363 = vmatpush2.msra.mxu0 0.0
    %364 = vmatprep.subr.mxu0 0.0
    %365 = vmatpush2.msra.mxu0 0.0
    %366 = vmatprep.subr.mxu0 0.0
    %367 = vmatpush2.msra.mxu0 0.0
    %368 = vmatprep.subr.mxu0 0.0
    %369 = vmatpush2.msra.mxu0 0.0
    %370 = vmatprep.subr.mxu0 0.0
    %371 = vmatpush2.msra.mxu0 0.0
    %372 = vmatprep.subr.mxu0 0.0
    %373 = vmatpush2.msra.mxu0 0.0
    %374 = vmatprep.subr.mxu0 0.0
    %375 = vmatpush2.msra.mxu0 0.0
    %376 = vmatprep.subr.mxu0 0.0
    %377 = vmatpush2.msra.mxu0 0.0
    %378 = vmatprep.subr.mxu0 0.0
    %379 = vmatpush2.msra.mxu0 0.0
    %380 = vmatprep.subr.mxu0 0.0
    %381 = vmatpush2.msra.mxu0 0.0
    %382 = vmatprep.subr.mxu0 0.0
    %383 = vmatpush2.msra.mxu0 0.0
    %384 = vmatprep.subr.mxu0 0.0
    %385 = vmatpush2.msra.mxu0 0.0
    %386 = vmatprep.subr.mxu0 0.0
    %387 = vmatpush2.msra.mxu0 0.0
    %388 = vmatprep.subr.mxu0 0.0
    %389 = vmatpush2.msra.mxu0 0.0
    %390 = vmatprep.subr.mxu0 0.0
    %391 = vmatpush2.msra.mxu0 0.0
    %392 = vmatprep.mubr.f32.mxu0 0.0
    %393 = vmatmul.mubr.f32.gmra.mxu0 %v294
    %v394 = vpop.f32.mrf.mxu0
    %v395 = vadd.f32 0.0, %v394
    %v396 = vpop.f32.mrf.mxu0
    %397 = vmatprep.mubr.f32.mxu0 0.0
    %398 = vmatmul.mubr.f32.gmra.mxu0 %v295
    %v399 = vpop.f32.mrf.mxu0
    %v400 = vadd.f32 0.0, %v399
    %v401 = vpop.f32.mrf.mxu0
    %402 = vmatprep.mubr.f32.mxu0 0.0
    %403 = vmatmul.mubr.f32.gmra.mxu0 %v296
    %v404 = vpop.f32.mrf.mxu0
    %v405 = vadd.f32 0.0, %v404
    %v406 = vpop.f32.mrf.mxu0
    %407 = vmatprep.mubr.f32.mxu0 0.0
    %408 = vmatmul.mubr.f32.gmra.mxu0 %v297
    %v409 = vpop.f32.mrf.mxu0
    %v410 = vadd.f32 0.0, %v409
    %v411 = vpop.f32.mrf.mxu0
    %412 = vmatprep.mubr.f32.mxu0 0.0
    %413 = vmatmul.mubr.f32.gmra.mxu0 %v298
    %v414 = vpop.f32.mrf.mxu0
    %v415 = vadd.f32 0.0, %v414
    %v416 = vpop.f32.mrf.mxu0
    %417 = vmatprep.mubr.f32.mxu0 0.0
    %418 = vmatmul.mubr.f32.gmra.mxu0 %v299
    %v419 = vpop.f32.mrf.mxu0
    %v420 = vadd.f32 0.0, %v419
    %v421 = vpop.f32.mrf.mxu0
    %422 = vmatprep.mubr.f32.mxu0 0.0
    %423 = vmatmul.mubr.f32.gmra.mxu0 %v300
    %v424 = vpop.f32.mrf.mxu0
    %v425 = vadd.f32 0.0, %v424
    %v426 = vpop.f32.mrf.mxu0
    %427 = vmatprep.mubr.f32.mxu0 0.0
    %428 = vmatmul.mubr.f32.gmra.mxu0 %v301
    %v429 = vpop.f32.mrf.mxu0
    %v430 = vadd.f32 0.0, %v429
    %v431 = vpop.f32.mrf.mxu0
    %432 = vmatprep.mubr.f32.mxu0 0.0
    %433 = vmatmul.mubr.f32.gmra.mxu0 %v302
    %v434 = vpop.f32.mrf.mxu0
    %v435 = vadd.f32 0.0, %v434
    %v436 = vpop.f32.mrf.mxu0
    %437 = vmatprep.mubr.f32.mxu0 0.0
    %438 = vmatmul.mubr.f32.gmra.mxu0 %v303
    %v439 = vpop.f32.mrf.mxu0
    %v440 = vadd.f32 0.0, %v439
    %v441 = vpop.f32.mrf.mxu0
    %442 = vmatprep.mubr.f32.mxu0 0.0
    %443 = vmatmul.mubr.f32.gmra.mxu0 %v304
    %v444 = vpop.f32.mrf.mxu0
    %v445 = vadd.f32 0.0, %v444
    %v446 = vpop.f32.mrf.mxu0
    %447 = vmatprep.mubr.f32.mxu0 0.0
    %448 = vmatmul.mubr.f32.gmra.mxu0 %v305
    %v449 = vpop.f32.mrf.mxu0
    %v450 = vadd.f32 0.0, %v449
    %v451 = vpop.f32.mrf.mxu0
    %452 = vmatprep.mubr.f32.mxu0 0.0
    %453 = vmatmul.mubr.f32.gmra.mxu0 %v306
    %v454 = vpop.f32.mrf.mxu0
    %v455 = vadd.f32 0.0, %v454
    %v456 = vpop.f32.mrf.mxu0
    %457 = vmatprep.mubr.f32.mxu0 0.0
    %458 = vmatmul.mubr.f32.gmra.mxu0 %v307
    %v459 = vpop.f32.mrf.mxu0
    %v460 = vadd.f32 0.0, %v459
    %v461 = vpop.f32.mrf.mxu0
    %462 = vmatprep.mubr.f32.mxu0 0.0
    %463 = vmatmul.mubr.f32.gmra.mxu0 %v308
    %v464 = vpop.f32.mrf.mxu0
    %v465 = vadd.f32 0.0, %v464
    %v466 = vpop.f32.mrf.mxu0
    %467 = vmatprep.mubr.f32.mxu0 0.0
    %468 = vmatmul.mubr.f32.gmra.mxu0 %v309
    %v469 = vpop.f32.mrf.mxu0
    %v470 = vadd.f32 0.0, %v469
    %v471 = vpop.f32.mrf.mxu0
    %472 = vdwg.mxu0
    %v473 = vstv %s327
    %v474 = vmul.f32 %v395, %v473
    %v475 = vmul.f32 %v400, %v473
    %v476 = vmul.f32 %v405, %v473
    %v477 = vmul.f32 %v410, %v473
    %v478 = vmul.f32 %v415, %v473
    %v479 = vmul.f32 %v420, %v473
    %v480 = vmul.f32 %v425, %v473
    %v481 = vmul.f32 %v430, %v473
    %v482 = vmul.f32 %v435, %v473
    %v483 = vmul.f32 %v440, %v473
    %v484 = vmul.f32 %v445, %v473
    %v485 = vmul.f32 %v450, %v473
    %v486 = vmul.f32 %v455, %v473
    %v487 = vmul.f32 %v460, %v473
    %v488 = vmul.f32 %v465, %v473
    %v489 = vmul.f32 %v470, %v473
    %v491 = vlaneseq
    %v492 = vshrl.u32 %v491, 7
    %v493 = vsub.s32 0, %v492
    %v494 = vrot.slane %v326, %v493
    %v496 = vadd.f32 %v474, %v494
    %v497 = vadd.f32 %v475, %v494
    %v498 = vadd.f32 %v476, %v494
    %v499 = vadd.f32 %v477, %v494
    %v500 = vadd.f32 %v478, %v494
    %v501 = vadd.f32 %v479, %v494
    %v502 = vadd.f32 %v480, %v494
    %v503 = vadd.f32 %v481, %v494
    %v504 = vadd.f32 %v482, %v494
    %v505 = vadd.f32 %v483, %v494
    %v506 = vadd.f32 %v484, %v494
    %v507 = vadd.f32 %v485, %v494
    %v508 = vadd.f32 %v486, %v494
    %v509 = vadd.f32 %v487, %v494
    %v510 = vadd.f32 %v488, %v494
    %v511 = vadd.f32 %v489, %v494
    %v512 = vmax.f32 %v496, 0.0
    %v513 = vmax.f32 %v497, 0.0
    %v514 = vmax.f32 %v498, 0.0
    %v515 = vmax.f32 %v499, 0.0
    %v516 = vmax.f32 %v500, 0.0
    %v517 = vmax.f32 %v501, 0.0
    %v518 = vmax.f32 %v502, 0.0
    %v519 = vmax.f32 %v503, 0.0
    %v520 = vmax.f32 %v504, 0.0
    %v521 = vmax.f32 %v505, 0.0
    %v522 = vmax.f32 %v506, 0.0
    %v523 = vmax.f32 %v507, 0.0
    %v524 = vmax.f32 %v508, 0.0
    %v525 = vmax.f32 %v509, 0.0
    %v526 = vmax.f32 %v510, 0.0
    %v527 = vmax.f32 %v511, 0.0
    %528 = vst [vmem:[#allocation10] sm:$0xff] %v512
    %529 = vst [vmem:[#allocation10 + $0x8] sm:$0xff] %v513
    %530 = vst [vmem:[#allocation10 + $0x10] sm:$0xff] %v514
    %531 = vst [vmem:[#allocation10 + $0x18] sm:$0xff] %v515
    %532 = vst [vmem:[#allocation10 + $0x20] sm:$0xff] %v516
    %533 = vst [vmem:[#allocation10 + $0x28] sm:$0xff] %v517
    %534 = vst [vmem:[#allocation10 + $0x30] sm:$0xff] %v518
    %535 = vst [vmem:[#allocation10 + $0x38] sm:$0xff] %v519
    %536 = vst [vmem:[#allocation10 + $0x40] sm:$0xff] %v520
    %537 = vst [vmem:[#allocation10 + $0x48] sm:$0xff] %v521
    %538 = vst [vmem:[#allocation10 + $0x50] sm:$0xff] %v522
    %539 = vst [vmem:[#allocation10 + $0x58] sm:$0xff] %v523
    %540 = vst [vmem:[#allocation10 + $0x60] sm:$0xff] %v524
    %541 = vst [vmem:[#allocation10 + $0x68] sm:$0xff] %v525
    %542 = vst [vmem:[#allocation10 + $0x70] sm:$0xff] %v526
    %543 = vst [vmem:[#allocation10 + $0x78] sm:$0xff] %v527
    // Predicated region
    $region42: #{tpu_custom_call.1} parent=1 // pred_check
      _
    $region43: #{tpu_custom_call.1} parent=1 // pred_check_branch
      %545 = sbr.rel (0) target = $region45
    $region44: #{tpu_custom_call.1} parent=1 // pred_region
      %s547 = ssub.s32 2048, 2048
      %548 = vsyncadd [#allocation4], %s547
      %s549 = sshll.u32 [#allocation10], 4
      %s550 = int_to_ptr.vmem [resolvable:$true] %s549
      %555 = dma.vmem_to_hbm [thread:$0]  %s550, 2048, %s6, [#allocation4], 128, 128, 8
    $region45: #{tpu_custom_call.1} parent=1 // pred_fallthru
      _
    // Predicated region
    $region46: #{tpu_custom_call.1} parent=1 // pred_check
      _
    $region47: #{tpu_custom_call.1} parent=1 // pred_check_branch
      %557 = sbr.rel (0) target = $region49
    $region48: #{tpu_custom_call.1} parent=1 // pred_region
      %558 = dma.done [#allocation4], 2048
    $region49: #{tpu_custom_call.1} parent=1 // pred_fallthru
      _
    %559 = vsyncpa [#allocation3], 1
    %560 = vsyncpa [#allocation8], 1
    %561 = vsyncpa [#allocation4], 1
    %562 = vsyncpa [#allocation5], 1

</llo_original>
